<compile_context>
chip_gen: v5e
topology: v5e:2x2
jax: 0.10.0
libtpu: 0.0.40
codegen_flags: <defaults>
</compile_context>

<pallas_src>
import functools

import numpy as np
import jax
import jax.numpy as jnp
from jax.experimental import pallas as pl
from jax.experimental.pallas import tpu as pltpu

LN_EPS = 1e-5  # nn.LayerNorm default (OwlViT post_layernorm)

# 8 non-center conv taps, enumerated in a fixed order shared by the wrapper
# (weight / mask packing) and the kernel (roll offsets).
_TAP_OFFSETS = [(dy, dx) for dy in (-1, 0, 1) for dx in (-1, 0, 1)
                if not (dy == 0 and dx == 0)]


# ----------------------------------------------------------------------------
# Pallas kernel: one grid step = one block of `bblk` images (row-padded).
# ----------------------------------------------------------------------------
def _fomo_kernel(tok_ref, gamma_ref, beta_ref, wall_ref, bconv_ref, geom_ref,
                 out_ref, *, w, num_classes, c_pad):
    C = num_classes
    Cp = c_pad
    M = tok_ref.shape[0]                               # padded rows per block

    # ---- post_layernorm over the embedding dim (CLS already dropped) -------
    # Tokens arrive bf16 (halved HBM stream); LN math in f32.
    x = tok_ref[...].astype(jnp.float32)               # (M, D)
    mean = jnp.mean(x, axis=-1, keepdims=True)
    xc = x - mean
    var = jnp.mean(xc * xc, axis=-1, keepdims=True)
    feats = xc * jax.lax.rsqrt(var + LN_EPS) * gamma_ref[...] + beta_ref[...]

    # ---- single fused bf16 MXU launch, f32 accumulation ---------------------
    # lanes [0, Cp)        : class logits (att_embeds, zero-padded to Cp)
    # lanes [Cp, Cp+40)    : 8 neighbour conv taps (5 channels each)
    # lanes [Cp+40, Cp+45) : centre conv tap
    head = jnp.dot(feats.astype(jnp.bfloat16), wall_ref[...],
                   preferred_element_type=jnp.float32)  # (M, Cp + 128)

    geom = geom_ref[...]                                # (M, 48) f32

    # ---- 3x3 conv neighbour taps via result-side row rolls ------------------
    # One full-width multiply by the pre-shifted border masks, then for each
    # tap an XLU sublane roll brings the neighbour's 5-lane result onto the
    # output row; wrapped rows (image / block / pad boundaries) are already
    # zeroed by the pre-shifted masks.
    others = head[:, Cp:Cp + 40] * geom[:, 0:40]        # (M, 40)
    conv = head[:, Cp + 40:Cp + 45] + bconv_ref[...]    # centre tap + bias
    for j, (dy, dx) in enumerate(_TAP_OFFSETS):
        off = dy * w + dx
        rolled = pltpu.roll(others, shift=(-off) % M, axis=0)
        conv = conv + rolled[:, 5 * j:5 * j + 5]

    bbox_deltas = conv[:, 0:4]                          # (M, 4) = l, t, r, b
    ctr = conv[:, 4:5]                                  # raw centerness (no sigmoid)

    # ---- class scores --------------------------------------------------------
    sig = jax.nn.sigmoid(head[:, :Cp])                  # pad lanes -> 0.5
    logits = sig * ctr                                  # (M, Cp)
    col = jax.lax.broadcasted_iota(jnp.int32, (M, Cp), 1)
    is_real = col < C
    logits = jnp.where(is_real, logits, 0.0)            # zero padded classes
    masked = jnp.where(is_real, logits, jnp.float32(-3.0e38))

    # ---- FCOS box decode: centers + deltas * [-1,-1,+1,+1] -------------------
    boxes = geom[:, 40:44] + bbox_deltas * geom[:, 44:48]

    # ---- scores / labels (max, first-occurrence argmax) ----------------------
    max_val = jnp.max(masked, axis=-1, keepdims=True)
    labels = jnp.min(jnp.where(masked == max_val, col, Cp), axis=-1,
                     keepdims=True)

    # Lane-dense 128-aligned packed output: [logits_pad | boxes,score,label,0..].
    # Labels round-trip through f32 (exact while C < 2^24).
    misc = jnp.concatenate(
        [boxes, max_val, labels.astype(jnp.float32),
         jnp.zeros((M, 128 - 6), jnp.float32)], axis=-1)    # (M, 128)
    out_ref[...] = jnp.concatenate([logits, misc], axis=-1)  # (M, Cp + 128)


# ----------------------------------------------------------------------------
# Glue: deterministic stand-in for the OwlViT vision backbone.
# ----------------------------------------------------------------------------
def _backbone_stub(pixel_values, params, patch_size):
    B, Cin, S, _ = pixel_values.shape
    h = w = S // patch_size
    HW = h * w
    D = params["w_patch"].shape[-1]
    patches = pixel_values.reshape(B, Cin, h, patch_size, w, patch_size)
    patches = patches.transpose(0, 2, 4, 1, 3, 5).reshape(
        B, HW, Cin * patch_size * patch_size)
    tokens = patches @ params["w_patch"] + params["b_patch"]
    cls = jnp.broadcast_to(params["cls_token"][None, None, :], (B, 1, D))
    return jnp.concatenate([cls, tokens], axis=1)      # (B, HW + 1, D)


def _att_embeds(params):
    # F.normalize(att, dim=-1).T  -> (D, C)
    att = params["att_raw"]
    return (att / jnp.linalg.norm(att, axis=-1, keepdims=True)).T


def _build_geom(h, w, stride, bblk, m_pad):
    """Per-block constants: [pre-shifted tap masks (40) | cx,cy,cx,cy | signs]."""
    hw = h * w
    m_real = bblk * hw
    ys, xs = np.meshgrid(np.arange(h), np.arange(w), indexing="ij")
    ys = ys.reshape(-1)
    xs = xs.reshape(-1)
    ys_b = np.tile(ys, bblk)
    xs_b = np.tile(xs, bblk)

    # Pre-shifted masks: premask[r, tap j] = valid_j((r - off_j) mod m_pad),
    # so that after rolling `others` by -off_j the mask multiplies exactly the
    # rows whose neighbour is in-image; wrapped / pad rows come out zero.
    premask = np.zeros((m_pad, 5 * len(_TAP_OFFSETS)), dtype=np.float64)
    for j, (dy, dx) in enumerate(_TAP_OFFSETS):
        off = dy * w + dx
        valid = np.zeros((m_pad,), dtype=np.float64)
        valid[:m_real] = ((ys_b + dy >= 0) & (ys_b + dy < h) &
                          (xs_b + dx >= 0) & (xs_b + dx < w))
        premask[:, 5 * j:5 * j + 5] = np.roll(valid, off)[:, None]

    cx = (xs.astype(np.float64) + 0.5) * stride
    cy = (ys.astype(np.float64) + 0.5) * stride
    centers = np.stack([cx, cy, cx, cy], axis=1)                    # (hw, 4)
    centers = np.concatenate([np.tile(centers, (bblk, 1)),
                              np.zeros((m_pad - m_real, 4))], axis=0)
    signs = np.tile(np.array([[-1.0, -1.0, 1.0, 1.0]]), (m_pad, 1))
    geom = np.concatenate([premask, centers, signs], axis=1).astype(np.float32)
    return jnp.asarray(geom)                                        # (m_pad, 48)


def _pick_batch_block(batch, hw, target_rows=2048):
    """Largest divisor of `batch` whose folded row count fits `target_rows`,
    keeping >= 2 grid steps whenever batch >= 2 (v7x has 2 TensorCores)."""
    best = 1
    for d in range(1, batch + 1):
        if batch % d != 0:
            continue
        if d * hw > target_rows and d != 1:
            continue
        if batch >= 2 and batch // d < 2:
            continue
        best = d
    return best


# ----------------------------------------------------------------------------
# Wrapper: pallas_call with a parallel per-batch-block grid.
# ----------------------------------------------------------------------------
def fomo_forward(pixel_values, params, *, patch_size, num_classes,
                 target_rows=2048):
    B, _, S, _ = pixel_values.shape
    h = w = S // patch_size
    HW = h * w
    D = params["w_patch"].shape[-1]
    C = num_classes
    stride = S // h

    # TODO(synk): pretrained OwlViT vision backbone replaced by this stub.
    last_hidden_state = _backbone_stub(pixel_values, params, patch_size)

    # Drop CLS (module discards it right after post_layernorm) and stream the
    # token matrix in bf16 (halves the dominant HBM read; LN runs in f32).
    tokens = last_hidden_state[:, 1:, :].reshape(B * HW, D).astype(jnp.bfloat16)

    bblk = _pick_batch_block(B, HW, target_rows=target_rows)
    n_steps = B // bblk
    m_real = bblk * HW
    sub = 16                                    # bf16 sublane packing
    m_pad = ((m_real + sub - 1) // sub) * sub
    if m_pad != m_real:
        tok = tokens.reshape(n_steps, m_real, D)
        tok = jnp.pad(tok, ((0, 0), (0, m_pad - m_real), (0, 0)))
        tokens = tok.reshape(n_steps * m_pad, D)

    # Fused, 128-lane-aligned bf16 weight:
    #   [att_embeds padded to Cp | 8 neighbour taps (40) | centre tap (5) | pad]
    c_pad = 128 * ((C + 127) // 128)
    tap_idx = [(dy + 1) * 3 + (dx + 1) for dy, dx in _TAP_OFFSETS]
    w_conv = params["w_conv"]                                   # (9, D, 5)
    att_p = jnp.pad(_att_embeds(params), ((0, 0), (0, c_pad - C)))
    taps = jnp.concatenate([w_conv[k] for k in tap_idx] + [w_conv[4]], axis=1)
    taps_p = jnp.pad(taps, ((0, 0), (0, 128 - 45)))
    w_all = jnp.concatenate([att_p, taps_p], axis=1).astype(jnp.bfloat16)
    n_w = c_pad + 128
    n_out = c_pad + 128

    geom = _build_geom(h, w, float(stride), bblk, m_pad)         # (m_pad, 48)

    kernel = functools.partial(_fomo_kernel, w=w, num_classes=C, c_pad=c_pad)

    # Explicit VMEM budget (double-buffered tiles + headroom), capped well
    # below v7x's 64 MiB physical VMEM.
    per_step_bytes = (m_pad * D * 2 + m_pad * 48 * 4 + D * n_w * 2
                      + m_pad * n_out * 4 + 2 * D * 4 + 5 * 4)
    vmem_limit = int(min(56 * 2**20, max(32 * 2**20, 3 * per_step_bytes)))

    grid_spec = pltpu.PrefetchScalarGridSpec(
        num_scalar_prefetch=0,
        grid=(n_steps,),
        in_specs=[
            pl.BlockSpec((m_pad, D), lambda i: (i, 0)),          # tokens (bf16)
            pl.BlockSpec((1, D), lambda i: (0, 0)),              # ln gamma
            pl.BlockSpec((1, D), lambda i: (0, 0)),              # ln beta
            pl.BlockSpec((D, n_w), lambda i: (0, 0)),            # fused weight
            pl.BlockSpec((1, 5), lambda i: (0, 0)),              # conv bias
            pl.BlockSpec((m_pad, 48), lambda i: (0, 0)),         # geometry/masks
        ],
        out_specs=pl.BlockSpec((m_pad, n_out), lambda i: (i, 0)),
    )

    packed = pl.pallas_call(
        kernel,
        out_shape=jax.ShapeDtypeStruct((n_steps * m_pad, n_out), jnp.float32),
        grid_spec=grid_spec,
        compiler_params=pltpu.CompilerParams(
            dimension_semantics=("parallel",),
            vmem_limit_bytes=vmem_limit),
    )(tokens, params["gamma"], params["beta"], w_all, params["b_conv"], geom)

    packed = packed.reshape(n_steps, m_pad, n_out)[:, :m_real, :]
    packed = packed.reshape(B, HW, n_out)
    return {
        "logits": packed[..., :C],                          # (B, HW, C)
        "boxes": packed[..., c_pad:c_pad + 4],              # (B, HW, 4)
        "scores": packed[..., c_pad + 4],                   # (B, HW)
        "labels": packed[..., c_pad + 5].astype(jnp.int32),  # (B, HW)
    }


# ----------------------------------------------------------------------------
# Pure-JAX reference (mirrors the PyTorch forward) for verification.
# `emulate_bf16=True` applies the same bf16 casts as the kernel wrapper so the
# structural (fusion / conv-by-roll / decode) math can be checked tightly.
# ----------------------------------------------------------------------------
def fomo_reference(pixel_values, params, *, patch_size, num_classes,
                   emulate_bf16=False):
    B, _, S, _ = pixel_values.shape
    h = w = S // patch_size
    HW = h * w
    D = params["w_patch"].shape[-1]
    stride = S // h

    hidden = _backbone_stub(pixel_values, params, patch_size)
    if emulate_bf16:
        hidden = hidden.astype(jnp.bfloat16).astype(jnp.float32)
    mean = hidden.mean(-1, keepdims=True)
    var = ((hidden - mean) ** 2).mean(-1, keepdims=True)
    ln = (hidden - mean) * jax.lax.rsqrt(var + LN_EPS)
    ln = ln * params["gamma"][0] + params["beta"][0]

    feats = ln[:, 1:, :]                               # (B, HW, D)
    att = _att_embeds(params)
    wk = params["w_conv"].reshape(3, 3, D, 5)          # HWIO
    if emulate_bf16:
        feats = feats.astype(jnp.bfloat16).astype(jnp.float32)
        att = att.astype(jnp.bfloat16).astype(jnp.float32)
        wk = wk.astype(jnp.bfloat16).astype(jnp.float32)

    fhw = feats.reshape(B, h, w, D)
    conv = jax.lax.conv_general_dilated(
        fhw, wk, window_strides=(1, 1), padding="SAME",
        dimension_numbers=("NHWC", "HWIO", "NHWC")) + params["b_conv"][0]
    conv = conv.reshape(B, HW, 5)
    bbox = conv[..., :4]
    ctr = conv[..., 4:5]

    logits = jax.nn.sigmoid(feats @ att) * ctr

    ys, xs = jnp.meshgrid(jnp.arange(h), jnp.arange(w), indexing="ij")
    cx = (xs.reshape(-1).astype(jnp.float32) + 0.5) * stride
    cy = (ys.reshape(-1).astype(jnp.float32) + 0.5) * stride
    cx = jnp.broadcast_to(cx[None, :], (B, HW))
    cy = jnp.broadcast_to(cy[None, :], (B, HW))
    l, t, r, b = bbox[..., 0], bbox[..., 1], bbox[..., 2], bbox[..., 3]
    boxes = jnp.stack([cx - l, cy - t, cx + r, cy + b], axis=-1)

    return {"logits": logits, "boxes": boxes,
            "scores": logits.max(-1), "labels": jnp.argmax(logits, -1)}


# ----------------------------------------------------------------------------
if __name__ == "__main__":
    B, Cin, S = 2, 3, 32          # pixel_values: (2, 3, 32, 32)
    P = 8                         # patch size  -> h = w = 4, HW = 16
    D = 32                        # vision hidden dim (small synthetic)
    n_known, n_unknown = 3, 2
    C = n_known + n_unknown

    key = jax.random.PRNGKey(0)
    ks = jax.random.split(key, 8)
    params = {
        "w_patch": 0.02 * jax.random.normal(ks[0], (Cin * P * P, D), jnp.float32),
        "b_patch": 0.02 * jax.random.normal(ks[1], (D,), jnp.float32),
        "cls_token": 0.02 * jax.random.normal(ks[2], (D,), jnp.float32),
        "gamma": 1.0 + 0.1 * jax.random.normal(ks[3], (1, D), jnp.float32),
        "beta": 0.1 * jax.random.normal(ks[4], (1, D), jnp.float32),
        # (3*3, D, 5): channels 0..3 = bbox_head, channel 4 = centerness_head
        "w_conv": 0.05 * jax.random.normal(ks[5], (9, D, 5), jnp.float32),
        "b_conv": 0.05 * jax.random.normal(ks[6], (1, 5), jnp.float32),
        "att_raw": jax.random.normal(ks[7], (C, D), jnp.float32),
    }
    pixel_values = jax.random.normal(jax.random.PRNGKey(1),
                                     (B, Cin, S, S), jnp.float32)

    out = fomo_forward(pixel_values, params, patch_size=P, num_classes=C)
    jax.block_until_ready(out)

    HW = (S // P) ** 2
    assert out["logits"].shape == (B, HW, C)
    assert out["boxes"].shape == (B, HW, 4)
    assert out["scores"].shape == (B, HW)
    assert out["labels"].shape == (B, HW)

    # Tight check vs. a reference with the same bf16 casts (validates the
    # kernel fusion, roll-based conv, masks and box decode).
    ref_bf16 = fomo_reference(pixel_values, params, patch_size=P,
                              num_classes=C, emulate_bf16=True)
    for k in ("logits", "boxes", "scores"):
        assert np.allclose(np.asarray(out[k]), np.asarray(ref_bf16[k]),
                           atol=3e-3, rtol=3e-3), f"mismatch (bf16 ref): {k}"
    assert (np.asarray(out["labels"]) == np.asarray(ref_bf16["labels"])).all()

    # Looser check vs. the pure-f32 reference mirroring the PyTorch forward
    # (bounds the bf16 MXU-input quantization error).
    ref = fomo_reference(pixel_values, params, patch_size=P, num_classes=C)
    for k in ("logits", "boxes", "scores"):
        assert np.allclose(np.asarray(out[k]), np.asarray(ref[k]),
                           atol=5e-2, rtol=5e-2), f"mismatch (f32 ref): {k}"
    rl = np.asarray(ref["logits"]).reshape(-1, C)
    top2 = np.sort(rl, axis=-1)[:, -2:]
    confident = (top2[:, 1] - top2[:, 0]) > 2e-2
    assert (np.asarray(out["labels"]).reshape(-1)[confident]
            == np.asarray(ref["labels"]).reshape(-1)[confident]).all()

    print("KERNEL_OK")
</pallas_src>

<mosaic_0001>
module attributes {stable_mosaic.version = 11 : i64} {
  func.func @_fomo_kernel(%arg0: i32, %arg1: memref<16x32xbf16, #tpu.memory_space<vmem>>, %arg2: memref<1x32xf32, #tpu.memory_space<vmem>>, %arg3: memref<1x32xf32, #tpu.memory_space<vmem>>, %arg4: memref<32x256xbf16, #tpu.memory_space<vmem>>, %arg5: memref<1x5xf32, #tpu.memory_space<vmem>>, %arg6: memref<16x48xf32, #tpu.memory_space<vmem>>, %arg7: memref<16x256xf32, #tpu.memory_space<vmem>>) attributes {dimension_semantics = [#tpu.dimension_semantics<parallel>], iteration_bounds = array<i64: 2>, scalar_prefetch = 0 : i64, scratch_operands = 0 : i64, tpu.core_type = #tpu.core_type<tc>, window_params = [{transform_indices = @transform_0, window_bounds = array<i64: 16, 32>}, {pipeline_mode = #tpu.pipeline_mode<synchronous>, transform_indices = @transform_1, window_bounds = array<i64: 1, 32>}, {pipeline_mode = #tpu.pipeline_mode<synchronous>, transform_indices = @transform_2, window_bounds = array<i64: 1, 32>}, {pipeline_mode = #tpu.pipeline_mode<synchronous>, transform_indices = @transform_3, window_bounds = array<i64: 32, 256>}, {pipeline_mode = #tpu.pipeline_mode<synchronous>, transform_indices = @transform_4, window_bounds = array<i64: 1, 5>}, {pipeline_mode = #tpu.pipeline_mode<synchronous>, transform_indices = @transform_5, window_bounds = array<i64: 16, 48>}, {transform_indices = @transform_6, window_bounds = array<i64: 16, 256>}]} {
    %c0 = arith.constant 0 : index
    %c0_0 = arith.constant 0 : index
    %0 = vector.load %arg1[%c0, %c0_0] : memref<16x32xbf16, #tpu.memory_space<vmem>>, vector<16x32xbf16>
    %1 = arith.extf %0 : vector<16x32xbf16> to vector<16x32xf32>
    %cst = arith.constant dense<0.000000e+00> : vector<16xf32>
    %2 = vector.multi_reduction <add>, %1, %cst [1] : vector<16x32xf32> to vector<16xf32>
    %3 = vector.shape_cast %2 : vector<16xf32> to vector<16x1xf32>
    %cst_1 = arith.constant 3.200000e+01 : f32
    %4 = vector.broadcast %cst_1 : f32 to vector<16x1xf32>
    %5 = arith.divf %3, %4 : vector<16x1xf32>
    %6 = vector.broadcast %5 : vector<16x1xf32> to vector<16x32xf32>
    %7 = arith.subf %1, %6 : vector<16x32xf32>
    %8 = arith.mulf %7, %7 : vector<16x32xf32>
    %cst_2 = arith.constant dense<0.000000e+00> : vector<16xf32>
    %9 = vector.multi_reduction <add>, %8, %cst_2 [1] : vector<16x32xf32> to vector<16xf32>
    %10 = vector.shape_cast %9 : vector<16xf32> to vector<16x1xf32>
    %cst_3 = arith.constant 3.200000e+01 : f32
    %11 = vector.broadcast %cst_3 : f32 to vector<16x1xf32>
    %12 = arith.divf %10, %11 : vector<16x1xf32>
    %cst_4 = arith.constant 9.99999974E-6 : f32
    %13 = vector.broadcast %cst_4 : f32 to vector<16x1xf32>
    %14 = arith.addf %12, %13 : vector<16x1xf32>
    %15 = math.rsqrt %14 : vector<16x1xf32>
    %16 = vector.broadcast %15 : vector<16x1xf32> to vector<16x32xf32>
    %17 = arith.mulf %7, %16 : vector<16x32xf32>
    %c0_5 = arith.constant 0 : index
    %c0_6 = arith.constant 0 : index
    %18 = vector.load %arg2[%c0_5, %c0_6] : memref<1x32xf32, #tpu.memory_space<vmem>>, vector<1x32xf32>
    %19 = vector.broadcast %18 : vector<1x32xf32> to vector<16x32xf32>
    %20 = arith.mulf %17, %19 : vector<16x32xf32>
    %c0_7 = arith.constant 0 : index
    %c0_8 = arith.constant 0 : index
    %21 = vector.load %arg3[%c0_7, %c0_8] : memref<1x32xf32, #tpu.memory_space<vmem>>, vector<1x32xf32>
    %22 = vector.broadcast %21 : vector<1x32xf32> to vector<16x32xf32>
    %23 = arith.addf %20, %22 : vector<16x32xf32>
    %24 = arith.truncf %23 : vector<16x32xf32> to vector<16x32xbf16>
    %c0_9 = arith.constant 0 : index
    %c0_10 = arith.constant 0 : index
    %25 = vector.load %arg4[%c0_9, %c0_10] : memref<32x256xbf16, #tpu.memory_space<vmem>>, vector<32x256xbf16>
    %cst_11 = arith.constant dense<0.000000e+00> : vector<16x256xf32>
    %26 = tpu.matmul %24, %25, %cst_11 {dimension_numbers = #tpu.dot_dimension_numbers<[1], [0], [0], [1], [0, 0, 1, 1], [], []>} : vector<16x32xbf16>, vector<32x256xbf16>, vector<16x256xf32> -> vector<16x256xf32>
    %c0_12 = arith.constant 0 : index
    %c0_13 = arith.constant 0 : index
    %27 = vector.load %arg6[%c0_12, %c0_13] : memref<16x48xf32, #tpu.memory_space<vmem>>, vector<16x48xf32>
    %28 = vector.extract_strided_slice %26 {offsets = [0, 128], sizes = [16, 40], strides = [1, 1]} : vector<16x256xf32> to vector<16x40xf32>
    %29 = vector.extract_strided_slice %27 {offsets = [0, 0], sizes = [16, 40], strides = [1, 1]} : vector<16x48xf32> to vector<16x40xf32>
    %30 = arith.mulf %28, %29 : vector<16x40xf32>
    %31 = vector.extract_strided_slice %26 {offsets = [0, 168], sizes = [16, 5], strides = [1, 1]} : vector<16x256xf32> to vector<16x5xf32>
    %c0_14 = arith.constant 0 : index
    %c0_15 = arith.constant 0 : index
    %32 = vector.load %arg5[%c0_14, %c0_15] : memref<1x5xf32, #tpu.memory_space<vmem>>, vector<1x5xf32>
    %33 = vector.broadcast %32 : vector<1x5xf32> to vector<16x5xf32>
    %34 = arith.addf %31, %33 : vector<16x5xf32>
    %c5_i32 = arith.constant 5 : i32
    %35 = tpu.dynamic_rotate %30 by %c5_i32 dim 0 : vector<16x40xf32>, i32 -> vector<16x40xf32>
    %36 = vector.extract_strided_slice %35 {offsets = [0, 0], sizes = [16, 5], strides = [1, 1]} : vector<16x40xf32> to vector<16x5xf32>
    %37 = arith.addf %34, %36 : vector<16x5xf32>
    %c4_i32 = arith.constant 4 : i32
    %38 = tpu.dynamic_rotate %30 by %c4_i32 dim 0 : vector<16x40xf32>, i32 -> vector<16x40xf32>
    %39 = vector.extract_strided_slice %38 {offsets = [0, 5], sizes = [16, 5], strides = [1, 1]} : vector<16x40xf32> to vector<16x5xf32>
    %40 = arith.addf %37, %39 : vector<16x5xf32>
    %c3_i32 = arith.constant 3 : i32
    %41 = tpu.dynamic_rotate %30 by %c3_i32 dim 0 : vector<16x40xf32>, i32 -> vector<16x40xf32>
    %42 = vector.extract_strided_slice %41 {offsets = [0, 10], sizes = [16, 5], strides = [1, 1]} : vector<16x40xf32> to vector<16x5xf32>
    %43 = arith.addf %40, %42 : vector<16x5xf32>
    %c1_i32 = arith.constant 1 : i32
    %44 = tpu.dynamic_rotate %30 by %c1_i32 dim 0 : vector<16x40xf32>, i32 -> vector<16x40xf32>
    %45 = vector.extract_strided_slice %44 {offsets = [0, 15], sizes = [16, 5], strides = [1, 1]} : vector<16x40xf32> to vector<16x5xf32>
    %46 = arith.addf %43, %45 : vector<16x5xf32>
    %c15_i32 = arith.constant 15 : i32
    %47 = tpu.dynamic_rotate %30 by %c15_i32 dim 0 : vector<16x40xf32>, i32 -> vector<16x40xf32>
    %48 = vector.extract_strided_slice %47 {offsets = [0, 20], sizes = [16, 5], strides = [1, 1]} : vector<16x40xf32> to vector<16x5xf32>
    %49 = arith.addf %46, %48 : vector<16x5xf32>
    %c13_i32 = arith.constant 13 : i32
    %50 = tpu.dynamic_rotate %30 by %c13_i32 dim 0 : vector<16x40xf32>, i32 -> vector<16x40xf32>
    %51 = vector.extract_strided_slice %50 {offsets = [0, 25], sizes = [16, 5], strides = [1, 1]} : vector<16x40xf32> to vector<16x5xf32>
    %52 = arith.addf %49, %51 : vector<16x5xf32>
    %c12_i32 = arith.constant 12 : i32
    %53 = tpu.dynamic_rotate %30 by %c12_i32 dim 0 : vector<16x40xf32>, i32 -> vector<16x40xf32>
    %54 = vector.extract_strided_slice %53 {offsets = [0, 30], sizes = [16, 5], strides = [1, 1]} : vector<16x40xf32> to vector<16x5xf32>
    %55 = arith.addf %52, %54 : vector<16x5xf32>
    %c11_i32 = arith.constant 11 : i32
    %56 = tpu.dynamic_rotate %30 by %c11_i32 dim 0 : vector<16x40xf32>, i32 -> vector<16x40xf32>
    %57 = vector.extract_strided_slice %56 {offsets = [0, 35], sizes = [16, 5], strides = [1, 1]} : vector<16x40xf32> to vector<16x5xf32>
    %58 = arith.addf %55, %57 : vector<16x5xf32>
    %59 = vector.extract_strided_slice %58 {offsets = [0, 0], sizes = [16, 4], strides = [1, 1]} : vector<16x5xf32> to vector<16x4xf32>
    %60 = vector.extract_strided_slice %58 {offsets = [0, 4], sizes = [16, 1], strides = [1, 1]} : vector<16x5xf32> to vector<16x1xf32>
    %61 = vector.extract_strided_slice %26 {offsets = [0, 0], sizes = [16, 128], strides = [1, 1]} : vector<16x256xf32> to vector<16x128xf32>
    %62 = arith.negf %61 : vector<16x128xf32>
    %63 = math.exp %62 : vector<16x128xf32>
    %cst_16 = arith.constant 1.000000e+00 : f32
    %64 = vector.broadcast %cst_16 : f32 to vector<16x128xf32>
    %65 = arith.addf %64, %63 : vector<16x128xf32>
    %66 = arith.divf %64, %65 : vector<16x128xf32>
    %67 = vector.broadcast %60 : vector<16x1xf32> to vector<16x128xf32>
    %68 = arith.mulf %66, %67 : vector<16x128xf32>
    %69 = tpu.iota {dimensions = array<i32: 1>} : vector<16x128xi32>
    %c5_i32_17 = arith.constant 5 : i32
    %70 = vector.broadcast %c5_i32_17 : i32 to vector<16x128xi32>
    %71 = arith.cmpi slt, %69, %70 : vector<16x128xi32>
    %cst_18 = arith.constant 0.000000e+00 : f32
    %72 = vector.broadcast %cst_18 : f32 to vector<16x128xf32>
    %73 = arith.select %71, %68, %72 : vector<16x128xi1>, vector<16x128xf32>
    %cst_19 = arith.constant -3.000000e+38 : f32
    %74 = vector.broadcast %cst_19 : f32 to vector<16x128xf32>
    %75 = arith.select %71, %73, %74 : vector<16x128xi1>, vector<16x128xf32>
    %76 = vector.extract_strided_slice %27 {offsets = [0, 40], sizes = [16, 4], strides = [1, 1]} : vector<16x48xf32> to vector<16x4xf32>
    %77 = vector.extract_strided_slice %27 {offsets = [0, 44], sizes = [16, 4], strides = [1, 1]} : vector<16x48xf32> to vector<16x4xf32>
    %78 = arith.mulf %59, %77 : vector<16x4xf32>
    %79 = arith.addf %76, %78 : vector<16x4xf32>
    %cst_20 = arith.constant dense<0xFF800000> : vector<16xf32>
    %80 = vector.multi_reduction <maximumf>, %75, %cst_20 [1] : vector<16x128xf32> to vector<16xf32>
    %81 = vector.shape_cast %80 : vector<16xf32> to vector<16x1xf32>
    %82 = vector.broadcast %81 : vector<16x1xf32> to vector<16x128xf32>
    %83 = arith.cmpf oeq, %75, %82 : vector<16x128xf32>
    %c128_i32 = arith.constant 128 : i32
    %84 = vector.broadcast %c128_i32 : i32 to vector<16x128xi32>
    %85 = arith.select %83, %69, %84 : vector<16x128xi1>, vector<16x128xi32>
    %cst_21 = arith.constant dense<2147483647> : vector<16xi32>
    %86 = vector.multi_reduction <minsi>, %85, %cst_21 [1] : vector<16x128xi32> to vector<16xi32>
    %87 = vector.shape_cast %86 : vector<16xi32> to vector<16x1xi32>
    %88 = arith.sitofp %87 : vector<16x1xi32> to vector<16x1xf32>
    %cst_22 = arith.constant 0.000000e+00 : f32
    %89 = vector.broadcast %cst_22 : f32 to vector<16x122xf32>
    %90 = tpu.concatenate %79, %81, %88, %89 in 1 : vector<16x4xf32>, vector<16x1xf32>, vector<16x1xf32>, vector<16x122xf32> -> vector<16x128xf32>
    %91 = tpu.concatenate %73, %90 in 1 : vector<16x128xf32>, vector<16x128xf32> -> vector<16x256xf32>
    %c0_23 = arith.constant 0 : index
    %c0_24 = arith.constant 0 : index
    %92 = vector.load %arg7[%c0_23, %c0_24] : memref<16x256xf32, #tpu.memory_space<vmem>>, vector<16x256xf32>
    tpu.vector_store %arg7[%c0_23, %c0_24], %91 {strides = array<i32>} : memref<16x256xf32, #tpu.memory_space<vmem>>, vector<16x256xf32>,
    return
  }
  func.func @transform_0(%arg0: i32) -> (i32, i32) {
    %c0_i32 = arith.constant 0 : i32
    %c0_i32_0 = arith.constant 0 : i32
    return %arg0, %c0_i32 : i32, i32
  }
  func.func @transform_1(%arg0: i32) -> (i32, i32) {
    %c0_i32 = arith.constant 0 : i32
    %c0_i32_0 = arith.constant 0 : i32
    %c0_i32_1 = arith.constant 0 : i32
    return %c0_i32, %c0_i32_0 : i32, i32
  }
  func.func @transform_2(%arg0: i32) -> (i32, i32) {
    %c0_i32 = arith.constant 0 : i32
    %c0_i32_0 = arith.constant 0 : i32
    %c0_i32_1 = arith.constant 0 : i32
    return %c0_i32, %c0_i32_0 : i32, i32
  }
  func.func @transform_3(%arg0: i32) -> (i32, i32) {
    %c0_i32 = arith.constant 0 : i32
    %c0_i32_0 = arith.constant 0 : i32
    %c0_i32_1 = arith.constant 0 : i32
    return %c0_i32, %c0_i32_0 : i32, i32
  }
  func.func @transform_4(%arg0: i32) -> (i32, i32) {
    %c0_i32 = arith.constant 0 : i32
    %c0_i32_0 = arith.constant 0 : i32
    %c0_i32_1 = arith.constant 0 : i32
    return %c0_i32, %c0_i32_0 : i32, i32
  }
  func.func @transform_5(%arg0: i32) -> (i32, i32) {
    %c0_i32 = arith.constant 0 : i32
    %c0_i32_0 = arith.constant 0 : i32
    %c0_i32_1 = arith.constant 0 : i32
    return %c0_i32, %c0_i32_0 : i32, i32
  }
  func.func @transform_6(%arg0: i32) -> (i32, i32) {
    %c0_i32 = arith.constant 0 : i32
    %c0_i32_0 = arith.constant 0 : i32
    return %arg0, %c0_i32 : i32, i32
  }
}

</mosaic_0001>

<llo_original>
// kernel: tpu_custom_call.1
$region0: #{tpu_custom_call.1}
  #allocation0 [shape = 'u32[]', space=smem, size = 0x4, offset = 0x4, fixed_abs, tag = 'smem constant byte address 0x4 - core index']
  #allocation1 [shape = 'u32[72,128]{1,0:T(1,128)}', space=vmem, size = 0x9000, scoped, tag = 'internal scratch']
  %s0 = inlined_call_operand.hbm [shape: bf16[32,32], index: 0, kind: input, shape index: {}]
  %s1 = inlined_call_operand.hbm [shape: f32[1,32], index: 1, kind: input, shape index: {}]
  %s2 = inlined_call_operand.vmem [shape: f32[1,32], index: 2, kind: input, shape index: {}]
  %s3 = inlined_call_operand.hbm [shape: bf16[32,256], index: 3, kind: input, shape index: {}]
  %s4 = inlined_call_operand.vmem [shape: f32[1,5], index: 4, kind: input, shape index: {}]
  %s5 = inlined_call_operand.hbm [shape: f32[16,48], index: 5, kind: input, shape index: {}]
  %s6 = inlined_call_operand.hbm [shape: f32[32,256], index: 6, kind: output, shape index: {}]
  %s7 = sld [smem:[#allocation0]]
  $region73: #{tpu_custom_call.1} parent=0
    _
  %s9 = ssub.s32 1, %s7
  %s10 = scalar_select 0, %s9, %s7
  $region1: #{tpu_custom_call.1} parent=0
    #allocation2 [shape = 'u8[8192]{0}', space=vmem, size = 0x2000, scoped, tag = 'input window, operand 0']
    #allocation3 [shape = 's32[2]{0}', space=sflag, size = 0x8, scoped, tag = 'scoped memory for tpu_custom_call.1']
    #allocation4 [shape = 's32[2]{0}', space=sflag, size = 0x8, scoped, tag = 'scoped memory for tpu_custom_call.1']
    #allocation5 [shape = 'u8[512]{0}', space=vmem, size = 0x400, scoped, tag = 'input window, operand 1, single buffered']
    #allocation6 [shape = 's32[1]{0}', space=sflag, size = 0x4, scoped, tag = 'scoped memory for tpu_custom_call.1']
    #allocation7 [shape = 'u8[16384]{0}', space=vmem, size = 0x4000, scoped, tag = 'input window, operand 3, single buffered']
    #allocation8 [shape = 'u8[8192]{0}', space=vmem, size = 0x2000, scoped, tag = 'input window, operand 5, single buffered']
    #allocation9 [shape = 's32[1]{0}', space=sflag, size = 0x4, scoped, tag = 'scoped memory for tpu_custom_call.1']
    #allocation10 [shape = 'u8[32768]{0}', space=vmem, size = 0x8000, scoped, tag = 'output window, operand 0']
    %11 = vsyncpa [#allocation3], 0
    %s12 = scalar_lea.sflag [#allocation3], 1
    %13 = vsyncpa %s12, 0
    %14 = vsyncpa [#allocation6], 0
    %15 = vsyncpa [#allocation9], 0
    %16 = vsyncpa [#allocation4], 0
    %s17 = scalar_lea.sflag [#allocation4], 1
    %18 = vsyncpa %s17, 0
    loop: start=0, step=1, limit=4
    $region2: #{tpu_custom_call.1} parent=1 // loop_pre_header
      _
    $region3: #{tpu_custom_call.1} parent=1 // loop_header
      %s20 = sphi 0, %s24
      %p21 = scmp.ge.s32.totalorder %s20, 4
      %s30 = sphi 0, %s32
      %s33 = sphi 0, %s30
      %s34 = sphi 0, %s33
      %s50 = sphi 0, %s34
      %s54 = sphi 0, %s54
      %s56 = sphi 0, %s54
      %s57 = sphi 0, %s56
      %s71 = sphi 0, %s57
      %s75 = sphi 0, %s75
      %s77 = sphi 0, %s75
      %s78 = sphi 0, %s77
      %s92 = sphi 0, %s78
      %s96 = sphi 0, %s96
      %s98 = sphi 0, %s96
      %s99 = sphi 0, %s98
      %s113 = sphi 0, %s99
      %s117 = sphi 0, %s117
      %s119 = sphi 0, %s117
      %s120 = sphi 0, %s119
      %s134 = sphi 0, %s120
      %s138 = sphi 0, %s138
      %s140 = sphi 0, %s138
      %s141 = sphi 0, %s140
      %s155 = sphi 0, %s141
      %s161 = sphi 0, %s163
      %s164 = sphi 0, %s161
      %s165 = sphi 0, %s164
      %s181 = sphi 0, %s165
    $region4: #{tpu_custom_call.1} parent=1 // loop_header_branch
      %23 = sbr.rel (%p21) target = $region8
    $region5: #{tpu_custom_call.1} parent=1 // loop_body
      %s25 = ssub.s32 %s20, 1
      %s26 = ssub.s32 %s20, 2
      %s27 = sadd.s32 %s20, 1
      %s28 = ssub.s32 %s20, %s27
      %p29 = scmp.eq.s32.totalorder %s28, 0
      %s31 = sadd.s32 %s30, 1
      %s32 = scalar_select %p29, %s30, %s31
      %p35 = pneg %p29
      %p36 = scmp.eq.s32.totalorder %s20, 1
      %p37 = por %p35, %p36
      %p38 = scmp.ne.s32.totalorder %s30, %s33
      %p39 = scmp.eq.s32.totalorder %s20, 0
      %p40 = por %p38, %p39
      %p41 = scmp.ne.s32.totalorder %s30, %s33
      %p42 = scmp.eq.s32.totalorder %s25, 1
      %p43 = por %p41, %p42
      %p44 = scmp.ne.s32.totalorder %s33, %s34
      %p45 = scmp.eq.s32.totalorder %s25, 0
      %p46 = por %p44, %p45
      %p47 = scmp.ne.s32.totalorder %s33, %s34
      %p48 = scmp.eq.s32.totalorder %s26, 1
      %p49 = por %p47, %p48
      %p51 = scmp.ne.s32.totalorder %s34, %s50
      %p52 = scmp.eq.s32.totalorder %s26, 0
      %p53 = por %p51, %p52
      %s55 = sadd.s32 %s54, 1
      %p58 = scmp.eq.s32.totalorder %s20, 1
      %p59 = scmp.ne.s32.totalorder %s54, %s56
      %p60 = scmp.eq.s32.totalorder %s20, 0
      %p61 = por %p59, %p60
      %p62 = scmp.ne.s32.totalorder %s54, %s56
      %p63 = scmp.eq.s32.totalorder %s25, 1
      %p64 = por %p62, %p63
      %p65 = scmp.ne.s32.totalorder %s56, %s57
      %p66 = scmp.eq.s32.totalorder %s25, 0
      %p67 = por %p65, %p66
      %p68 = scmp.ne.s32.totalorder %s56, %s57
      %p69 = scmp.eq.s32.totalorder %s26, 1
      %p70 = por %p68, %p69
      %p72 = scmp.ne.s32.totalorder %s57, %s71
      %p73 = scmp.eq.s32.totalorder %s26, 0
      %p74 = por %p72, %p73
      %s76 = sadd.s32 %s75, 1
      %p79 = scmp.eq.s32.totalorder %s20, 1
      %p80 = scmp.ne.s32.totalorder %s75, %s77
      %p81 = scmp.eq.s32.totalorder %s20, 0
      %p82 = por %p80, %p81
      %p83 = scmp.ne.s32.totalorder %s75, %s77
      %p84 = scmp.eq.s32.totalorder %s25, 1
      %p85 = por %p83, %p84
      %p86 = scmp.ne.s32.totalorder %s77, %s78
      %p87 = scmp.eq.s32.totalorder %s25, 0
      %p88 = por %p86, %p87
      %p89 = scmp.ne.s32.totalorder %s77, %s78
      %p90 = scmp.eq.s32.totalorder %s26, 1
      %p91 = por %p89, %p90
      %p93 = scmp.ne.s32.totalorder %s78, %s92
      %p94 = scmp.eq.s32.totalorder %s26, 0
      %p95 = por %p93, %p94
      %s97 = sadd.s32 %s96, 1
      %p100 = scmp.eq.s32.totalorder %s20, 1
      %p101 = scmp.ne.s32.totalorder %s96, %s98
      %p102 = scmp.eq.s32.totalorder %s20, 0
      %p103 = por %p101, %p102
      %p104 = scmp.ne.s32.totalorder %s96, %s98
      %p105 = scmp.eq.s32.totalorder %s25, 1
      %p106 = por %p104, %p105
      %p107 = scmp.ne.s32.totalorder %s98, %s99
      %p108 = scmp.eq.s32.totalorder %s25, 0
      %p109 = por %p107, %p108
      %p110 = scmp.ne.s32.totalorder %s98, %s99
      %p111 = scmp.eq.s32.totalorder %s26, 1
      %p112 = por %p110, %p111
      %p114 = scmp.ne.s32.totalorder %s99, %s113
      %p115 = scmp.eq.s32.totalorder %s26, 0
      %p116 = por %p114, %p115
      %s118 = sadd.s32 %s117, 1
      %p121 = scmp.eq.s32.totalorder %s20, 1
      %p122 = scmp.ne.s32.totalorder %s117, %s119
      %p123 = scmp.eq.s32.totalorder %s20, 0
      %p124 = por %p122, %p123
      %p125 = scmp.ne.s32.totalorder %s117, %s119
      %p126 = scmp.eq.s32.totalorder %s25, 1
      %p127 = por %p125, %p126
      %p128 = scmp.ne.s32.totalorder %s119, %s120
      %p129 = scmp.eq.s32.totalorder %s25, 0
      %p130 = por %p128, %p129
      %p131 = scmp.ne.s32.totalorder %s119, %s120
      %p132 = scmp.eq.s32.totalorder %s26, 1
      %p133 = por %p131, %p132
      %p135 = scmp.ne.s32.totalorder %s120, %s134
      %p136 = scmp.eq.s32.totalorder %s26, 0
      %p137 = por %p135, %p136
      %s139 = sadd.s32 %s138, 1
      %p142 = scmp.eq.s32.totalorder %s20, 1
      %p143 = scmp.ne.s32.totalorder %s138, %s140
      %p144 = scmp.eq.s32.totalorder %s20, 0
      %p145 = por %p143, %p144
      %p146 = scmp.ne.s32.totalorder %s138, %s140
      %p147 = scmp.eq.s32.totalorder %s25, 1
      %p148 = por %p146, %p147
      %p149 = scmp.ne.s32.totalorder %s140, %s141
      %p150 = scmp.eq.s32.totalorder %s25, 0
      %p151 = por %p149, %p150
      %p152 = scmp.ne.s32.totalorder %s140, %s141
      %p153 = scmp.eq.s32.totalorder %s26, 1
      %p154 = por %p152, %p153
      %p156 = scmp.ne.s32.totalorder %s141, %s155
      %p157 = scmp.eq.s32.totalorder %s26, 0
      %p158 = por %p156, %p157
      %s159 = ssub.s32 %s20, %s27
      %p160 = scmp.eq.s32.totalorder %s159, 0
      %s162 = sadd.s32 %s161, 1
      %s163 = scalar_select %p160, %s161, %s162
      %p166 = pneg %p160
      %p167 = scmp.eq.s32.totalorder %s20, 1
      %p168 = por %p166, %p167
      %p169 = scmp.ne.s32.totalorder %s161, %s164
      %p170 = scmp.eq.s32.totalorder %s20, 0
      %p171 = por %p169, %p170
      %p172 = scmp.ne.s32.totalorder %s161, %s164
      %p173 = scmp.eq.s32.totalorder %s25, 1
      %p174 = por %p172, %p173
      %p175 = scmp.ne.s32.totalorder %s164, %s165
      %p176 = scmp.eq.s32.totalorder %s25, 0
      %p177 = por %p175, %p176
      %p178 = scmp.ne.s32.totalorder %s164, %s165
      %p179 = scmp.eq.s32.totalorder %s26, 1
      %p180 = por %p178, %p179
      %p182 = scmp.ne.s32.totalorder %s165, %s181
      %p183 = scmp.eq.s32.totalorder %s26, 0
      %p184 = por %p182, %p183
      %p185 = scmp.le.s32.totalorder 1, %s20
      %p186 = scmp.lt.s32.totalorder %s20, 3
      %p187 = pnand %p185, %p186
      %p188 = pneg %p187
      // Predicated region
      $region9: #{tpu_custom_call.1} parent=5 // pred_check
        _
      $region10: #{tpu_custom_call.1} parent=5 // pred_check_branch
        %190 = sbr.rel (%p187) target = $region12
      $region11: #{tpu_custom_call.1} parent=5 // pred_region
        %s191 = ssub.s32 %s20, 1
        // Predicated region
        $region13: #{tpu_custom_call.1} parent=11 // pred_check
          %p192 = pneg %p67
        $region14: #{tpu_custom_call.1} parent=11 // pred_check_branch
          %194 = sbr.rel (%p192) target = $region16
        $region15: #{tpu_custom_call.1} parent=11 // pred_region
          %196 = vsyncadd [#allocation6], 0
          %s198 = sshll.u32 %s1, 4
          %s199 = int_to_ptr.hbm [resolvable:$true] %s198
          %s200 = sshll.u32 [#allocation5], 4
          %s201 = int_to_ptr.vmem [resolvable:$true] %s200
          %203 = dma.hbm_to_vmem [thread:$0]  %s199, 16, %s201, [#allocation6]
        $region16: #{tpu_custom_call.1} parent=11 // pred_fallthru
          _
        // Predicated region
        $region17: #{tpu_custom_call.1} parent=11 // pred_check
          %p204 = pneg %p88
        $region18: #{tpu_custom_call.1} parent=11 // pred_check_branch
          %206 = sbr.rel (%p204) target = $region20
        $region19: #{tpu_custom_call.1} parent=11 // pred_region
          _
        $region20: #{tpu_custom_call.1} parent=11 // pred_fallthru
          _
        // Predicated region
        $region21: #{tpu_custom_call.1} parent=11 // pred_check
          %p207 = pneg %p109
        $region22: #{tpu_custom_call.1} parent=11 // pred_check_branch
          %209 = sbr.rel (%p207) target = $region24
        $region23: #{tpu_custom_call.1} parent=11 // pred_region
          %211 = vsyncadd [#allocation6], 0
          %s212 = sshll.u32 %s3, 4
          %s213 = int_to_ptr.hbm [resolvable:$true] %s212
          %s214 = sshll.u32 [#allocation7], 4
          %s215 = int_to_ptr.vmem [resolvable:$true] %s214
          %220 = dma.hbm_to_vmem [thread:$0]  %s213, 512, %s215, [#allocation6], 128, 128, 8
        $region24: #{tpu_custom_call.1} parent=11 // pred_fallthru
          _
        // Predicated region
        $region25: #{tpu_custom_call.1} parent=11 // pred_check
          %p221 = pneg %p130
        $region26: #{tpu_custom_call.1} parent=11 // pred_check_branch
          %223 = sbr.rel (%p221) target = $region28
        $region27: #{tpu_custom_call.1} parent=11 // pred_region
          _
        $region28: #{tpu_custom_call.1} parent=11 // pred_fallthru
          _
        // Predicated region
        $region29: #{tpu_custom_call.1} parent=11 // pred_check
          %p224 = pneg %p151
        $region30: #{tpu_custom_call.1} parent=11 // pred_check_branch
          %226 = sbr.rel (%p224) target = $region32
        $region31: #{tpu_custom_call.1} parent=11 // pred_region
          %228 = vsyncadd [#allocation9], 0
          %s229 = sshll.u32 %s5, 4
          %s230 = int_to_ptr.hbm [resolvable:$true] %s229
          %s231 = sshll.u32 [#allocation8], 4
          %s232 = int_to_ptr.vmem [resolvable:$true] %s231
          %237 = dma.hbm_to_vmem [thread:$0]  %s230, 256, %s232, [#allocation9], 128, 128, 8
        $region32: #{tpu_custom_call.1} parent=11 // pred_fallthru
          _
      $region12: #{tpu_custom_call.1} parent=5 // pred_fallthru
        _
      %p238 = scmp.lt.s32.totalorder %s20, 2
      // Predicated region
      $region33: #{tpu_custom_call.1} parent=5 // pred_check
        %p239 = pneg %p238
      $region34: #{tpu_custom_call.1} parent=5 // pred_check_branch
        %241 = sbr.rel (%p239) target = $region36
      $region35: #{tpu_custom_call.1} parent=5 // pred_region
        // Predicated region
        $region37: #{tpu_custom_call.1} parent=35 // pred_check
          %p242 = pneg %p40
        $region38: #{tpu_custom_call.1} parent=35 // pred_check_branch
          %244 = sbr.rel (%p242) target = $region40
        $region39: #{tpu_custom_call.1} parent=35 // pred_region
          %s245 = sand.u32 %s30, 1
          %s246 = scalar_lea.sflag [#allocation3], %s245
          %s247 = sand.u32 %s30, 1
          %s248 = smul.addr %s247, 8
          %s249 = scalar_lea.vmem [#allocation2], %s248
          %s250 = smul.u32 2, %s20
          %252 = vsyncadd %s246, 0
          %s253 = smul.addr %s250, 4
          %s254 = scalar_lea.hbm %s0, %s253
          %s255 = sshll.u32 %s254, 4
          %s256 = int_to_ptr.hbm [resolvable:$true] %s255
          %s257 = sshll.u32 %s249, 4
          %s258 = int_to_ptr.vmem [resolvable:$true] %s257
          %263 = dma.hbm_to_vmem [thread:$0]  %s256, 128, %s258, %s246, 64, 64, 4
        $region40: #{tpu_custom_call.1} parent=35 // pred_fallthru
          _
      $region36: #{tpu_custom_call.1} parent=5 // pred_fallthru
        _
      %p264 = scmp.le.s32.totalorder 1, %s20
      %p265 = scmp.lt.s32.totalorder %s20, 3
      %p266 = pnand %p264, %p265
      %p267 = pneg %p266
      // Predicated region
      $region41: #{tpu_custom_call.1} parent=5 // pred_check
        _
      $region42: #{tpu_custom_call.1} parent=5 // pred_check_branch
        %269 = sbr.rel (%p266) target = $region44
      $region43: #{tpu_custom_call.1} parent=5 // pred_region
        %s270 = ssub.s32 %s20, 1
        %s271 = sand.u32 %s33, 1
        %s272 = scalar_lea.sflag [#allocation3], %s271
        %s273 = sand.u32 %s33, 1
        %s274 = smul.addr %s273, 8
        %s275 = scalar_lea.vmem [#allocation2], %s274
        // Predicated region
        $region45: #{tpu_custom_call.1} parent=43 // pred_check
          %p276 = pneg %p46
        $region46: #{tpu_custom_call.1} parent=43 // pred_check_branch
          %278 = sbr.rel (%p276) target = $region48
        $region47: #{tpu_custom_call.1} parent=43 // pred_region
          %280 = dma.done %s272, 128
        $region48: #{tpu_custom_call.1} parent=43 // pred_fallthru
          _
        // Predicated region
        $region49: #{tpu_custom_call.1} parent=43 // pred_check
          %p281 = pneg %p67
        $region50: #{tpu_custom_call.1} parent=43 // pred_check_branch
          %283 = sbr.rel (%p281) target = $region52
        $region51: #{tpu_custom_call.1} parent=43 // pred_region
          %285 = dma.done [#allocation6], 16
        $region52: #{tpu_custom_call.1} parent=43 // pred_fallthru
          _
        // Predicated region
        $region53: #{tpu_custom_call.1} parent=43 // pred_check
          %p286 = pneg %p109
        $region54: #{tpu_custom_call.1} parent=43 // pred_check_branch
          %288 = sbr.rel (%p286) target = $region56
        $region55: #{tpu_custom_call.1} parent=43 // pred_region
          %290 = dma.done [#allocation6], 512
        $region56: #{tpu_custom_call.1} parent=43 // pred_fallthru
          _
        // Predicated region
        $region57: #{tpu_custom_call.1} parent=43 // pred_check
          %p291 = pneg %p151
        $region58: #{tpu_custom_call.1} parent=43 // pred_check_branch
          %293 = sbr.rel (%p291) target = $region60
        $region59: #{tpu_custom_call.1} parent=43 // pred_region
          %295 = dma.done [#allocation9], 256
        $region60: #{tpu_custom_call.1} parent=43 // pred_fallthru
          _
        %s296 = sand.u32 %s33, 1
        %s297 = scalar_lea.sflag [#allocation3], %s296
        %s298 = sand.u32 %s33, 1
        %s299 = smul.addr %s298, 8
        %s300 = scalar_lea.vmem [#allocation2], %s299
        %p301 = pneg %p46
        %p302 = pneg %p43
        %p303 = pneg %p67
        %p304 = pneg %p64
        %p305 = pneg %p88
        %p306 = pneg %p85
        %p307 = pneg %p109
        %p308 = pneg %p106
        %p309 = pneg %p130
        %p310 = pneg %p127
        %p311 = pneg %p151
        %p312 = pneg %p148
        %p313 = pneg %p177
        %p314 = pneg %p174
        %s315 = sand.u32 %s164, 1
        %s316 = scalar_lea.sflag [#allocation4], %s315
        %s317 = sand.u32 %s164, 1
        %s318 = smul.addr %s317, 32
        %s319 = scalar_lea.vmem [#allocation10], %s318
        %s320 = smul.u32 2, %s25
        %s321 = smul.u32 2, %s25
        %v323 = vld [vmem:[%s275] sm:$0xf]
        %v324 = vld [vmem:[%s275 + $0x4] sm:$0xf]
        %v325 = vunpack.c.l.bf16 %v323
        %v326 = vunpack.c.l.bf16 %v324
        %vm327 = vcmask 261120
        %v328 = vsel %vm327, %v325, 0.0
        %329 = vadd.xlane.f32.xlu0 %v328
        %v330 = vpop.xlane.xlu0 %329
        %v331 = vsel %vm327, %v326, 0.0
        %332 = vadd.xlane.f32.xlu0 %v331
        %v333 = vpop.xlane.xlu0 %332
        %v334 = vrcp.pop 32.0
        %v335 = vmul.f32 32.0, %v334
        %v336 = vsub.f32 1.0, %v335
        %v337 = vmul.f32 %v334, %v336
        %v338 = vadd.f32 %v334, %v337
        %vm339 = vweird.f32 %v334
        %v340 = vsel %vm339, %v334, %v338
        %v341 = vmul.f32 %v330, %v340
        %v342 = vmul.f32 %v333, %v340
        %v343 = vsub.f32 %v325, %v341
        %v344 = vsub.f32 %v326, %v342
        %v345 = vmul.f32 %v343, %v343
        %v346 = vmul.f32 %v344, %v344
        %v347 = vsel %vm327, %v345, 0.0
        %348 = vadd.xlane.f32.xlu0 %v347
        %v349 = vpop.xlane.xlu0 %348
        %v350 = vsel %vm327, %v346, 0.0
        %351 = vadd.xlane.f32.xlu0 %v350
        %v352 = vpop.xlane.xlu0 %351
        %v353 = vmul.f32 %v349, %v340
        %v354 = vmul.f32 %v352, %v340
        %v355 = vadd.f32 %v353, 1e-05
        %v356 = vadd.f32 %v354, 1e-05
        %v357 = vrsqrt.pop %v355
        %v358 = vmul.f32 %v357, %v355
        %v359 = vmul.f32 %v358, %v357
        %v360 = vmul.f32 0.5, %v359
        %v361 = vsub.f32 1.5, %v360
        %v362 = vmul.f32 %v357, %v361
        %vm363 = vweird.f32 %v355
        %vm364 = vweird.f32 %v357
        %vm365 = vmor %vm363, %vm364
        %v366 = vsel %vm365, %v357, %v362
        %v367 = vrsqrt.pop %v356
        %v368 = vmul.f32 %v367, %v356
        %v369 = vmul.f32 %v368, %v367
        %v370 = vmul.f32 0.5, %v369
        %v371 = vsub.f32 1.5, %v370
        %v372 = vmul.f32 %v367, %v371
        %vm373 = vweird.f32 %v356
        %vm374 = vweird.f32 %v367
        %vm375 = vmor %vm373, %vm374
        %v376 = vsel %vm375, %v367, %v372
        %v377 = vmul.f32 %v343, %v366
        %v378 = vmul.f32 %v344, %v376
        %v379 = vld [vmem:[#allocation5] sm:$0x1]
        %v381 = vperm.slane %v379, 0
        %v383 = vmul.f32 %v377, %v381
        %v384 = vmul.f32 %v378, %v381
        %v385 = vld [vmem:[%s2] sm:$0x1]
        %v387 = vperm.slane %v385, 0
        %v389 = vadd.f32 %v383, %v387
        %v390 = vadd.f32 %v384, %v387
        %v391 = vpack.c.bf16 %v390, %v389
        %v392 = vld [vmem:[#allocation7] sm:$0xff]
        %v393 = vld [vmem:[#allocation7 + $0x8] sm:$0xff]
        %v394 = vld [vmem:[#allocation7 + $0x10] sm:$0xff]
        %v395 = vld [vmem:[#allocation7 + $0x18] sm:$0xff]
        %v400 = vunpack.c.l.b16 %v392
        %v401 = vunpack.c.h.b16 %v392
        %v402 = vunpack.c.l.b16 %v393
        %v403 = vunpack.c.h.b16 %v393
        %v404 = vunpack.c.l.b16 %v394
        %v405 = vunpack.c.h.b16 %v394
        %v406 = vunpack.c.l.b16 %v395
        %v407 = vunpack.c.h.b16 %v395
        %v408 = vpack.c.b16 %v402, %v400
        %v409 = vpack.c.b16 %v403, %v401
        %v410 = vpack.c.b16 %v406, %v404
        %v411 = vpack.c.b16 %v407, %v405
        %v417 = vsel %vm327, %v391, 0
        %419 = vmatpush.bf16.msra.mxu0 0
        %420 = vmatpush.bf16.msra.mxu0 0
        %421 = vmatpush.bf16.msra.mxu0 0
        %422 = vmatpush.bf16.msra.mxu0 0
        %423 = vmatpush.bf16.msra.mxu0 0
        %424 = vmatpush.bf16.msra.mxu0 0
        %425 = vmatpush.bf16.msra.mxu0 %v410
        %426 = vmatpush.bf16.msra.mxu0 %v408
        %427 = vmatmul.bf16.gmra.mxu0 %v417
        %v428 = vpop.f32.mrf.mxu0
        %v429 = vadd.f32 0.0, %v428
        %v430 = vpop.f32.mrf.mxu0
        %v431 = vadd.f32 0.0, %v430
        %432 = vdwg.mxu0
        %433 = vmatpush.bf16.msra.mxu0 0
        %434 = vmatpush.bf16.msra.mxu0 0
        %435 = vmatpush.bf16.msra.mxu0 0
        %436 = vmatpush.bf16.msra.mxu0 0
        %437 = vmatpush.bf16.msra.mxu0 0
        %438 = vmatpush.bf16.msra.mxu0 0
        %439 = vmatpush.bf16.msra.mxu0 %v411
        %440 = vmatpush.bf16.msra.mxu0 %v409
        %441 = vmatmul.bf16.gmra.mxu0 %v417
        %v442 = vpop.f32.mrf.mxu0
        %v443 = vadd.f32 0.0, %v442
        %v444 = vpop.f32.mrf.mxu0
        %v445 = vadd.f32 0.0, %v444
        %446 = vdwg.mxu0
        %v447 = vld [vmem:[#allocation8] sm:$0xff]
        %v448 = vld [vmem:[#allocation8 + $0x8] sm:$0xff]
        %v449 = vmul.f32 %v443, %v447
        %v450 = vmul.f32 %v445, %v448
        %v451 = vld [vmem:[%s4] sm:$0x1]
        %v453 = vperm.slane %v451, 0
        %454 = vrot.lane.b32.xlu0 %v453, 40
        %v455 = vpop.permute.xlu0 %454
        %v457 = vadd.f32 %v443, %v455
        %v458 = vadd.f32 %v445, %v455
        %v459 = vrot.slane %v449, 3
        %v460 = vrot.slane %v450, 3
        %v461 = vlaneseq
        %v462 = vshrl.u32 %v461, 7
        %vm463 = vcmp.lt.s32.totalorder %v462, 5
        %v464 = vsel %vm463, %v459, %v460
        %v465 = vsel %vm463, %v460, %v459
        %468 = vrot.lane.b32.xlu0 %v465, 40
        %v469 = vpop.permute.xlu0 %468
        %470 = vrot.lane.b32.xlu0 %v464, 40
        %v471 = vpop.permute.xlu0 %470
        %v474 = vadd.f32 %v457, %v469
        %v475 = vadd.f32 %v458, %v471
        %v476 = vrot.slane %v449, 4
        %v477 = vrot.slane %v450, 4
        %vm478 = vcmp.lt.s32.totalorder %v462, 4
        %v479 = vsel %vm478, %v476, %v477
        %v480 = vsel %vm478, %v477, %v476
        %483 = vrot.lane.b32.xlu0 %v480, 35
        %v484 = vpop.permute.xlu0 %483
        %485 = vrot.lane.b32.xlu0 %v479, 35
        %v486 = vpop.permute.xlu0 %485
        %v489 = vadd.f32 %v474, %v484
        %v490 = vadd.f32 %v475, %v486
        %v491 = vrot.slane %v449, 5
        %v492 = vrot.slane %v450, 5
        %vm493 = vcmp.lt.s32.totalorder %v462, 3
        %v494 = vsel %vm493, %v491, %v492
        %v495 = vsel %vm493, %v492, %v491
        %498 = vrot.lane.b32.xlu0 %v495, 30
        %v499 = vpop.permute.xlu0 %498
        %500 = vrot.lane.b32.xlu0 %v494, 30
        %v501 = vpop.permute.xlu0 %500
        %v504 = vadd.f32 %v489, %v499
        %v505 = vadd.f32 %v490, %v501
        %v506 = vrot.slane %v449, 7
        %v507 = vrot.slane %v450, 7
        %vm508 = vcmp.lt.s32.totalorder %v462, 1
        %v509 = vsel %vm508, %v506, %v507
        %v510 = vsel %vm508, %v507, %v506
        %513 = vrot.lane.b32.xlu0 %v510, 25
        %v514 = vpop.permute.xlu0 %513
        %515 = vrot.lane.b32.xlu0 %v509, 25
        %v516 = vpop.permute.xlu0 %515
        %v519 = vadd.f32 %v504, %v514
        %v520 = vadd.f32 %v505, %v516
        %v521 = vrot.slane %v449, 1
        %v522 = vrot.slane %v450, 1
        %vm523 = vcmp.lt.s32.totalorder %v462, 7
        %v524 = vsel %vm523, %v521, %v522
        %v525 = vsel %vm523, %v522, %v521
        %528 = vrot.lane.b32.xlu0 %v524, 20
        %v529 = vpop.permute.xlu0 %528
        %530 = vrot.lane.b32.xlu0 %v525, 20
        %v531 = vpop.permute.xlu0 %530
        %v534 = vadd.f32 %v519, %v529
        %v535 = vadd.f32 %v520, %v531
        %536 = vrot.lane.b32.xlu0 %v464, 15
        %v537 = vpop.permute.xlu0 %536
        %538 = vrot.lane.b32.xlu0 %v465, 15
        %v539 = vpop.permute.xlu0 %538
        %v542 = vadd.f32 %v534, %v537
        %v543 = vadd.f32 %v535, %v539
        %544 = vrot.lane.b32.xlu0 %v479, 10
        %v545 = vpop.permute.xlu0 %544
        %546 = vrot.lane.b32.xlu0 %v480, 10
        %v547 = vpop.permute.xlu0 %546
        %v550 = vadd.f32 %v542, %v545
        %v551 = vadd.f32 %v543, %v547
        %552 = vrot.lane.b32.xlu0 %v494, 5
        %v553 = vpop.permute.xlu0 %552
        %554 = vrot.lane.b32.xlu0 %v495, 5
        %v555 = vpop.permute.xlu0 %554
        %v558 = vadd.f32 %v550, %v553
        %v559 = vadd.f32 %v551, %v555
        %v560 = vxor.u32 %v429, 2147483648
        %v561 = vxor.u32 %v431, 2147483648
        %v562 = vmul.f32 %v560, 1.442695
        %v563 = vpow.pop %v562
        %v564 = vmul.f32 %v561, 1.442695
        %v565 = vpow.pop %v564
        %v566 = vadd.f32 %v563, 1.0
        %v567 = vadd.f32 %v565, 1.0
        %v568 = vrcp.pop %v566
        %v569 = vmul.f32 %v566, %v568
        %v570 = vsub.f32 1.0, %v569
        %v571 = vmul.f32 %v568, %v570
        %v572 = vadd.f32 %v568, %v571
        %vm573 = vweird.f32 %v566
        %vm574 = vweird.f32 %v568
        %vm575 = vmor %vm573, %vm574
        %v576 = vsel %vm575, %v568, %v572
        %v577 = vand.u32 2147483647, %v566
        %vm578 = vcmp.eq.f32.partialorder %v577, 8.507059e+37
        %v579 = vand.u32 %v566, 2147483648
        %v580 = vor.u32 1.1754944e-38, %v579
        %v581 = vsel %vm578, %v580, %v576
        %v582 = vmul.f32 1.0, %v581
        %v583 = vrcp.pop %v567
        %v584 = vmul.f32 %v567, %v583
        %v585 = vsub.f32 1.0, %v584
        %v586 = vmul.f32 %v583, %v585
        %v587 = vadd.f32 %v583, %v586
        %vm588 = vweird.f32 %v567
        %vm589 = vweird.f32 %v583
        %vm590 = vmor %vm588, %vm589
        %v591 = vsel %vm590, %v583, %v587
        %v592 = vand.u32 2147483647, %v567
        %vm593 = vcmp.eq.f32.partialorder %v592, 8.507059e+37
        %v594 = vand.u32 %v567, 2147483648
        %v595 = vor.u32 1.1754944e-38, %v594
        %v596 = vsel %vm593, %v595, %v591
        %v597 = vmul.f32 1.0, %v596
        %599 = vset.pattern.permute.xlu0 44
        %600 = vperm.xlu0 %599, %v558
        %v601 = vpop.permute.xlu0 %600
        %604 = vset.pattern.permute.xlu0 44
        %605 = vperm.xlu0 %604, %v559
        %v606 = vpop.permute.xlu0 %605
        %v608 = vmul.f32 %v582, %v601
        %v609 = vmul.f32 %v597, %v606
        %v610 = vlaneseq
        %v611 = vand.u32 %v610, 127
        %vm612 = vcmp.lt.s32.totalorder %v611, 5
        %v613 = vsel %vm612, %v608, 0.0
        %v614 = vsel %vm612, %v609, 0.0
        %v615 = vsel %vm612, %v608, -3e+38
        %v616 = vsel %vm612, %v609, -3e+38
        %619 = vrot.lane.b32.xlu0 %v447, 124
        %v620 = vpop.permute.xlu0 %619
        %621 = vrot.lane.b32.xlu0 %v448, 124
        %v622 = vpop.permute.xlu0 %621
        %v625 = vmul.f32 %v558, %v620
        %v626 = vmul.f32 %v559, %v622
        %v627 = vadd.f32 %v447, %v625
        %v628 = vadd.f32 %v448, %v626
        %629 = vmax.xlane.f32.xlu0 %v615
        %v630 = vpop.xlane.xlu0 %629
        %631 = vmax.xlane.f32.xlu0 %v616
        %v632 = vpop.xlane.xlu0 %631
        %vm633 = vcmp.eq.f32.partialorder %v615, %v630
        %vm634 = vcmp.eq.f32.partialorder %v616, %v632
        %v635 = vsel %vm633, %v611, 128
        %v636 = vsel %vm634, %v611, 128
        %v637 = vand.u32 %v635, 65535
        %v638 = vshra.s32 %v635, 16
        %v639 = vcvt.s32.f32 %v637
        %v640 = vcvt.s32.f32 %v638
        %641 = vmin.xlane.f32.xlu0 %v640
        %v642 = vpop.xlane.xlu0 %641
        %vm643 = vcmp.eq.f32.partialorder %v640, %v642
        %v644 = vsel %vm643, %v639, inf
        %645 = vmin.xlane.f32.xlu0 %v644
        %v646 = vpop.xlane.xlu0 %645
        %v647 = vcvt.f32.s32 %v646
        %v648 = vcvt.f32.s32 %v642
        %v649 = vshll.u32 %v648, 16
        %v650 = vadd.s32 %v649, %v647
        %v651 = vand.u32 %v636, 65535
        %v652 = vshra.s32 %v636, 16
        %v653 = vcvt.s32.f32 %v651
        %v654 = vcvt.s32.f32 %v652
        %655 = vmin.xlane.f32.xlu0 %v654
        %v656 = vpop.xlane.xlu0 %655
        %vm657 = vcmp.eq.f32.partialorder %v654, %v656
        %v658 = vsel %vm657, %v653, inf
        %659 = vmin.xlane.f32.xlu0 %v658
        %v660 = vpop.xlane.xlu0 %659
        %v661 = vcvt.f32.s32 %v660
        %v662 = vcvt.f32.s32 %v656
        %v663 = vshll.u32 %v662, 16
        %v664 = vadd.s32 %v663, %v661
        %v665 = vcvt.s32.f32 %v650
        %v666 = vcvt.s32.f32 %v664
        %669 = vrot.lane.b32.xlu0 %v627, 88
        %v670 = vpop.permute.xlu0 %669
        %671 = vrot.lane.b32.xlu0 %v628, 88
        %v672 = vpop.permute.xlu0 %671
        %vm675 = vcmask 31744
        %v676 = vsel %vm675, %v670, %v630
        %v677 = vsel %vm675, %v672, %v632
        %vm678 = vcmask 39936
        %v679 = vsel %vm678, %v676, %v665
        %v680 = vsel %vm678, %v677, %v666
        %vm681 = vcmask 48128
        %v682 = vsel %vm681, %v679, 0.0
        %v683 = vsel %vm681, %v680, 0.0
        %684 = vst [vmem:[%s319] sm:$0xff] %v613
        %685 = vst [vmem:[%s319 + $0x8] sm:$0xff] %v682
        %686 = vst [vmem:[%s319 + $0x10] sm:$0xff] %v614
        %687 = vst [vmem:[%s319 + $0x18] sm:$0xff] %v683
        %s688 = sand.u32 %s164, 1
        %s689 = scalar_lea.sflag [#allocation4], %s688
        %s690 = sand.u32 %s164, 1
        %s691 = smul.addr %s690, 32
        %s692 = scalar_lea.vmem [#allocation10], %s691
        // Predicated region
        $region61: #{tpu_custom_call.1} parent=43 // pred_check
          %p693 = pneg %p174
        $region62: #{tpu_custom_call.1} parent=43 // pred_check_branch
          %695 = sbr.rel (%p693) target = $region64
        $region63: #{tpu_custom_call.1} parent=43 // pred_region
          %s696 = smul.u32 2, %s25
          %698 = vsyncadd %s689, 0
          %s699 = smul.addr %s696, 2
          %s700 = smul.addr %s699, 8
          %s701 = scalar_lea.hbm %s6, %s700
          %s702 = sshll.u32 %s692, 4
          %s703 = int_to_ptr.vmem [resolvable:$true] %s702
          %s704 = sshll.u32 %s701, 4
          %s705 = int_to_ptr.hbm [resolvable:$true] %s704
          %710 = dma.vmem_to_hbm [thread:$0]  %s703, 512, %s705, %s689, 256, 256, 16
        $region64: #{tpu_custom_call.1} parent=43 // pred_fallthru
          _
      $region44: #{tpu_custom_call.1} parent=5 // pred_fallthru
        _
      %p711 = scmp.le.s32.totalorder 2, %s20
      // Predicated region
      $region65: #{tpu_custom_call.1} parent=5 // pred_check
        %p712 = pneg %p711
      $region66: #{tpu_custom_call.1} parent=5 // pred_check_branch
        %714 = sbr.rel (%p712) target = $region68
      $region67: #{tpu_custom_call.1} parent=5 // pred_region
        %s715 = ssub.s32 %s20, 2
        // Predicated region
        $region69: #{tpu_custom_call.1} parent=67 // pred_check
          %p716 = pneg %p180
        $region70: #{tpu_custom_call.1} parent=67 // pred_check_branch
          %718 = sbr.rel (%p716) target = $region72
        $region71: #{tpu_custom_call.1} parent=67 // pred_region
          %s719 = sand.u32 %s165, 1
          %s720 = scalar_lea.sflag [#allocation4], %s719
          %s721 = sand.u32 %s165, 1
          %s722 = smul.addr %s721, 32
          %s723 = scalar_lea.vmem [#allocation10], %s722
          %725 = dma.done %s720, 512
        $region72: #{tpu_custom_call.1} parent=67 // pred_fallthru
          _
      $region68: #{tpu_custom_call.1} parent=5 // pred_fallthru
        _
    $region6: #{tpu_custom_call.1} parent=1 // loop_footer
      %s24 = sadd.s32 1, %s20
    $region7: #{tpu_custom_call.1} parent=1 // loop_footer_branch
      %19 = sbr.rel target = $region3
    $region8: #{tpu_custom_call.1} parent=1 // loop_exit
      _
    %726 = vsyncpa [#allocation3], 1
    %s727 = scalar_lea.sflag [#allocation3], 1
    %728 = vsyncpa %s727, 1
    %729 = vsyncpa [#allocation6], 1
    %730 = vsyncpa [#allocation9], 1
    %731 = vsyncpa [#allocation4], 1
    %s732 = scalar_lea.sflag [#allocation4], 1
    %733 = vsyncpa %s732, 1

</llo_original>
